<compile_context>
chip_gen: v7x
topology: tpu7x:2x2x1
jax: 0.10.0
libtpu: 0.0.40
codegen_flags: <defaults>
</compile_context>

<pallas_src>
import functools
import math

import jax
import jax.numpy as jnp
from jax import lax
from jax.experimental import pallas as pl
from jax.experimental.pallas import tpu as pltpu


def _round_up(x, m):
    return ((x + m - 1) // m) * m


def bayesian_linear_kernel(x_ref, wmu_ref, wls_ref, weps_ref,
                           bmu_ref, bls_ref, beps_ref, o_ref, acc_ref):
    k = pl.program_id(2)

    @pl.when(k == 0)
    def _():
        acc_ref[...] = jnp.zeros_like(acc_ref)

    # Reparameterized weight tile (out_tile, in_tile).  exp in f32 (accurate
    # even if params are stored in bf16), cast to the matmul input dtype.
    w = (wmu_ref[...].astype(jnp.float32)
         + jnp.exp(wls_ref[...].astype(jnp.float32))
         * weps_ref[...].astype(jnp.float32)).astype(x_ref.dtype)

    # Contract last dims of both operands -> (tm, tn); no transpose of w.
    acc_ref[...] += lax.dot_general(
        x_ref[...], w,
        dimension_numbers=(((1,), (1,)), ((), ())),
        preferred_element_type=jnp.float32)

    @pl.when(k == pl.num_programs(2) - 1)
    def _():
        # Bias reparameterized once per output tile, fused with writeback.
        b = (bmu_ref[...].astype(jnp.float32)
             + jnp.exp(bls_ref[...].astype(jnp.float32))
             * beps_ref[...].astype(jnp.float32))               # (1, tn)
        o_ref[...] = (acc_ref[...] + b).astype(o_ref.dtype)


@functools.partial(jax.jit, static_argnames=("tm", "tn", "tk"))
def bayesian_linear(x, weight_mu, weight_log_sigma, weight_eps,
                    bias_mu, bias_log_sigma, bias_eps,
                    *, tm=256, tn=256, tk=512):
    """x: (B, in_features) -> (B, out_features)."""
    B, K = x.shape
    N, _ = weight_mu.shape

    # Clamp tile sizes to the (padded) problem size; keep (8, 128) alignment.
    tm = min(tm, _round_up(B, 8))
    tn = min(tn, _round_up(N, 128))
    tk = min(tk, _round_up(K, 128))

    Bp = _round_up(B, tm)
    Kp = _round_up(K, tk)
    Np = _round_up(N, tn)

    # Zero-padding is exact: padded x columns are 0, padded weight rows/cols
    # are mu=0, eps=0 -> W=0, padded bias lanes -> b=0; all sliced off below.
    pad2 = lambda a, r, c: jnp.pad(a, ((0, r - a.shape[0]), (0, c - a.shape[1])))
    x_p = pad2(x, Bp, Kp)
    wmu_p = pad2(weight_mu, Np, Kp)
    wls_p = pad2(weight_log_sigma, Np, Kp)
    weps_p = pad2(weight_eps, Np, Kp)
    bmu_p = jnp.pad(bias_mu, (0, Np - N)).reshape(1, Np)
    bls_p = jnp.pad(bias_log_sigma, (0, Np - N)).reshape(1, Np)
    beps_p = jnp.pad(bias_eps, (0, Np - N)).reshape(1, Np)

    grid = (Bp // tm, Np // tn, Kp // tk)

    out = pl.pallas_call(
        bayesian_linear_kernel,
        out_shape=jax.ShapeDtypeStruct((Bp, Np), x.dtype),
        grid_spec=pltpu.PrefetchScalarGridSpec(
            num_scalar_prefetch=0,
            grid=grid,
            in_specs=[
                pl.BlockSpec((tm, tk), lambda i, j, k: (i, k)),   # x
                pl.BlockSpec((tn, tk), lambda i, j, k: (j, k)),   # weight_mu
                pl.BlockSpec((tn, tk), lambda i, j, k: (j, k)),   # weight_log_sigma
                pl.BlockSpec((tn, tk), lambda i, j, k: (j, k)),   # weight_eps
                pl.BlockSpec((1, tn), lambda i, j, k: (0, j)),    # bias_mu
                pl.BlockSpec((1, tn), lambda i, j, k: (0, j)),    # bias_log_sigma
                pl.BlockSpec((1, tn), lambda i, j, k: (0, j)),    # bias_eps
            ],
            out_specs=pl.BlockSpec((tm, tn), lambda i, j, k: (i, j)),
            scratch_shapes=[pltpu.VMEM((tm, tn), jnp.float32)],
        ),
        compiler_params=pltpu.CompilerParams(
            dimension_semantics=("parallel", "parallel", "arbitrary"),
            vmem_limit_bytes=64 * 1024 * 1024,
        ),
    )(x_p, wmu_p, wls_p, weps_p, bmu_p, bls_p, beps_p)

    return out[:B, :N]


def init_params(key, in_features, out_features, stdv_init=0.1):
    """Deterministic synthetic init mirroring BayesianLinear.reset_parameters()."""
    k_wmu, k_bmu, k_weps, k_beps = jax.random.split(key, 4)
    fan_in_std = 1.0 / math.sqrt(in_features)
    weight_mu = fan_in_std * jax.random.normal(
        k_wmu, (out_features, in_features), jnp.float32)
    bias_mu = jax.random.uniform(
        k_bmu, (out_features,), jnp.float32, -fan_in_std, fan_in_std)
    stdv_transform = math.log(math.exp(stdv_init) - 1.0)
    weight_log_sigma = jnp.full((out_features, in_features), stdv_transform,
                                jnp.float32)
    bias_log_sigma = jnp.full((out_features,), stdv_transform, jnp.float32)
    # sample() with radial=False: eps ~ N(0, 1)
    weight_eps = jax.random.normal(k_weps, (out_features, in_features),
                                   jnp.float32)
    bias_eps = jax.random.normal(k_beps, (out_features,), jnp.float32)
    return (weight_mu, weight_log_sigma, weight_eps,
            bias_mu, bias_log_sigma, bias_eps)


if __name__ == "__main__":
    key = jax.random.PRNGKey(0)
    k_x, k_p = jax.random.split(key)

    batch, in_features, out_features = 8, 32, 16
    x = jax.random.normal(k_x, (batch, in_features), jnp.float32)
    (weight_mu, weight_log_sigma, weight_eps,
     bias_mu, bias_log_sigma, bias_eps) = init_params(
        k_p, in_features, out_features, stdv_init=0.1)

    out = bayesian_linear(x, weight_mu, weight_log_sigma, weight_eps,
                          bias_mu, bias_log_sigma, bias_eps)
    out = jax.block_until_ready(out)

    # Reference check in plain JAX.
    w_ref = weight_mu + jnp.exp(weight_log_sigma) * weight_eps
    b_ref = bias_mu + jnp.exp(bias_log_sigma) * bias_eps
    expected = x @ w_ref.T + b_ref
    assert out.shape == (batch, out_features)
    assert jnp.allclose(out, expected, atol=1e-5, rtol=1e-5)

    print("KERNEL_OK")
</pallas_src>

<mosaic_0001>
module attributes {stable_mosaic.version = 11 : i64} {
  func.func @bayesian_linear_kernel(%arg0: i32, %arg1: i32, %arg2: i32, %arg3: memref<8x128xf32, #tpu.memory_space<vmem>>, %arg4: memref<128x128xf32, #tpu.memory_space<vmem>>, %arg5: memref<128x128xf32, #tpu.memory_space<vmem>>, %arg6: memref<128x128xf32, #tpu.memory_space<vmem>>, %arg7: memref<1x128xf32, #tpu.memory_space<vmem>>, %arg8: memref<1x128xf32, #tpu.memory_space<vmem>>, %arg9: memref<1x128xf32, #tpu.memory_space<vmem>>, %arg10: memref<8x128xf32, #tpu.memory_space<vmem>>, %arg11: memref<8x128xf32, #tpu.memory_space<vmem>>) attributes {dimension_semantics = [#tpu.dimension_semantics<parallel>, #tpu.dimension_semantics<parallel>, #tpu.dimension_semantics<arbitrary>], iteration_bounds = array<i64: 1, 1, 1>, scalar_prefetch = 0 : i64, scratch_operands = 1 : i64, tpu.core_type = #tpu.core_type<tc>, window_params = [{transform_indices = @transform_0, window_bounds = array<i64: 8, 128>}, {transform_indices = @transform_1, window_bounds = array<i64: 128, 128>}, {transform_indices = @transform_2, window_bounds = array<i64: 128, 128>}, {transform_indices = @transform_3, window_bounds = array<i64: 128, 128>}, {transform_indices = @transform_4, window_bounds = array<i64: 1, 128>}, {transform_indices = @transform_5, window_bounds = array<i64: 1, 128>}, {transform_indices = @transform_6, window_bounds = array<i64: 1, 128>}, {transform_indices = @transform_7, window_bounds = array<i64: 8, 128>}]} {
    %c0_i32 = arith.constant 0 : i32
    %0 = arith.cmpi eq, %arg2, %c0_i32 : i32
    %1 = arith.extui %0 : i1 to i32
    %c0_i32_0 = arith.constant 0 : i32
    %2 = arith.cmpi ne, %1, %c0_i32_0 : i32
    scf.if %2 {
      %cst_14 = arith.constant 0.000000e+00 : f32
      %17 = vector.broadcast %cst_14 : f32 to vector<8x128xf32>
      %c0_15 = arith.constant 0 : index
      %c0_16 = arith.constant 0 : index
      %18 = vector.load %arg11[%c0_15, %c0_16] : memref<8x128xf32, #tpu.memory_space<vmem>>, vector<8x128xf32>
      tpu.vector_store %arg11[%c0_15, %c0_16], %17 {strides = array<i32>} : memref<8x128xf32, #tpu.memory_space<vmem>>, vector<8x128xf32>,
    } else {
    }
    %c0 = arith.constant 0 : index
    %c0_1 = arith.constant 0 : index
    %3 = vector.load %arg4[%c0, %c0_1] : memref<128x128xf32, #tpu.memory_space<vmem>>, vector<128x128xf32>
    %c0_2 = arith.constant 0 : index
    %c0_3 = arith.constant 0 : index
    %4 = vector.load %arg5[%c0_2, %c0_3] : memref<128x128xf32, #tpu.memory_space<vmem>>, vector<128x128xf32>
    %5 = math.exp %4 : vector<128x128xf32>
    %c0_4 = arith.constant 0 : index
    %c0_5 = arith.constant 0 : index
    %6 = vector.load %arg6[%c0_4, %c0_5] : memref<128x128xf32, #tpu.memory_space<vmem>>, vector<128x128xf32>
    %7 = arith.mulf %5, %6 : vector<128x128xf32>
    %8 = arith.addf %3, %7 : vector<128x128xf32>
    %c0_6 = arith.constant 0 : index
    %c0_7 = arith.constant 0 : index
    %9 = vector.load %arg11[%c0_6, %c0_7] : memref<8x128xf32, #tpu.memory_space<vmem>>, vector<8x128xf32>
    %c0_8 = arith.constant 0 : index
    %c0_9 = arith.constant 0 : index
    %10 = vector.load %arg3[%c0_8, %c0_9] : memref<8x128xf32, #tpu.memory_space<vmem>>, vector<8x128xf32>
    %cst = arith.constant dense<0.000000e+00> : vector<8x128xf32>
    %11 = tpu.matmul %10, %8, %cst {dimension_numbers = #tpu.dot_dimension_numbers<[1], [1], [0], [0], [0, 0, 1, 0], [], []>} : vector<8x128xf32>, vector<128x128xf32>, vector<8x128xf32> -> vector<8x128xf32>
    %12 = arith.addf %9, %11 : vector<8x128xf32>
    %c0_10 = arith.constant 0 : index
    %c0_11 = arith.constant 0 : index
    %13 = vector.load %arg11[%c0_10, %c0_11] : memref<8x128xf32, #tpu.memory_space<vmem>>, vector<8x128xf32>
    tpu.vector_store %arg11[%c0_10, %c0_11], %12 {strides = array<i32>} : memref<8x128xf32, #tpu.memory_space<vmem>>, vector<8x128xf32>,
    %c0_i32_12 = arith.constant 0 : i32
    %14 = arith.cmpi eq, %arg2, %c0_i32_12 : i32
    %15 = arith.extui %14 : i1 to i32
    %c0_i32_13 = arith.constant 0 : i32
    %16 = arith.cmpi ne, %15, %c0_i32_13 : i32
    scf.if %16 {
      %c0_14 = arith.constant 0 : index
      %c0_15 = arith.constant 0 : index
      %17 = vector.load %arg7[%c0_14, %c0_15] : memref<1x128xf32, #tpu.memory_space<vmem>>, vector<1x128xf32>
      %c0_16 = arith.constant 0 : index
      %c0_17 = arith.constant 0 : index
      %18 = vector.load %arg8[%c0_16, %c0_17] : memref<1x128xf32, #tpu.memory_space<vmem>>, vector<1x128xf32>
      %19 = math.exp %18 : vector<1x128xf32>
      %c0_18 = arith.constant 0 : index
      %c0_19 = arith.constant 0 : index
      %20 = vector.load %arg9[%c0_18, %c0_19] : memref<1x128xf32, #tpu.memory_space<vmem>>, vector<1x128xf32>
      %21 = arith.mulf %19, %20 : vector<1x128xf32>
      %22 = arith.addf %17, %21 : vector<1x128xf32>
      %c0_20 = arith.constant 0 : index
      %c0_21 = arith.constant 0 : index
      %23 = vector.load %arg11[%c0_20, %c0_21] : memref<8x128xf32, #tpu.memory_space<vmem>>, vector<8x128xf32>
      %24 = vector.broadcast %22 : vector<1x128xf32> to vector<8x128xf32>
      %25 = arith.addf %23, %24 : vector<8x128xf32>
      %c0_22 = arith.constant 0 : index
      %c0_23 = arith.constant 0 : index
      %26 = vector.load %arg10[%c0_22, %c0_23] : memref<8x128xf32, #tpu.memory_space<vmem>>, vector<8x128xf32>
      tpu.vector_store %arg10[%c0_22, %c0_23], %25 {strides = array<i32>} : memref<8x128xf32, #tpu.memory_space<vmem>>, vector<8x128xf32>,
    } else {
    }
    return
  }
  func.func @transform_0(%arg0: i32, %arg1: i32, %arg2: i32) -> (i32, i32) {
    %c0_i32 = arith.constant 0 : i32
    return %arg0, %arg2 : i32, i32
  }
  func.func @transform_1(%arg0: i32, %arg1: i32, %arg2: i32) -> (i32, i32) {
    %c0_i32 = arith.constant 0 : i32
    return %arg1, %arg2 : i32, i32
  }
  func.func @transform_2(%arg0: i32, %arg1: i32, %arg2: i32) -> (i32, i32) {
    %c0_i32 = arith.constant 0 : i32
    return %arg1, %arg2 : i32, i32
  }
  func.func @transform_3(%arg0: i32, %arg1: i32, %arg2: i32) -> (i32, i32) {
    %c0_i32 = arith.constant 0 : i32
    return %arg1, %arg2 : i32, i32
  }
  func.func @transform_4(%arg0: i32, %arg1: i32, %arg2: i32) -> (i32, i32) {
    %c0_i32 = arith.constant 0 : i32
    %c0_i32_0 = arith.constant 0 : i32
    return %c0_i32, %arg1 : i32, i32
  }
  func.func @transform_5(%arg0: i32, %arg1: i32, %arg2: i32) -> (i32, i32) {
    %c0_i32 = arith.constant 0 : i32
    %c0_i32_0 = arith.constant 0 : i32
    return %c0_i32, %arg1 : i32, i32
  }
  func.func @transform_6(%arg0: i32, %arg1: i32, %arg2: i32) -> (i32, i32) {
    %c0_i32 = arith.constant 0 : i32
    %c0_i32_0 = arith.constant 0 : i32
    return %c0_i32, %arg1 : i32, i32
  }
  func.func @transform_7(%arg0: i32, %arg1: i32, %arg2: i32) -> (i32, i32) {
    %c0_i32 = arith.constant 0 : i32
    return %arg0, %arg1 : i32, i32
  }
}

</mosaic_0001>

<llo_original>
// kernel: bayesian_linear.1
$region0: #{bayesian_linear.1}
  #allocation0 [shape = 'u32[]', space=smem, size = 0x4, offset = 0x4, fixed_abs, tag = 'smem constant byte address 0x4 - core index']
  #allocation1 [shape = 'u32[144,128]{1,0:T(1,128)}', space=vmem, size = 0x12000, scoped, tag = 'internal scratch']
  #allocation2 [shape = 'f32[8,128]{1,0:T(8,128)}', space=vmem, size = 0x1000, scoped, tag = 'scratch operand']
  %s0 = inlined_call_operand.hbm [shape: f32[8,128], index: 0, kind: input, shape index: {}]
  %s1 = inlined_call_operand.hbm [shape: f32[128,128], index: 1, kind: input, shape index: {}]
  %s2 = inlined_call_operand.hbm [shape: f32[128,128], index: 2, kind: input, shape index: {}]
  %s3 = inlined_call_operand.hbm [shape: f32[128,128], index: 3, kind: input, shape index: {}]
  %s4 = inlined_call_operand.hbm [shape: f32[1,128], index: 4, kind: input, shape index: {}]
  %s5 = inlined_call_operand.hbm [shape: f32[1,128], index: 5, kind: input, shape index: {}]
  %s6 = inlined_call_operand.hbm [shape: f32[1,128], index: 6, kind: input, shape index: {}]
  %s7 = inlined_call_operand.hbm [shape: f32[8,128], index: 7, kind: output, shape index: {}]
  %s8 = sld [smem:[#allocation0]]
  $region74: #{bayesian_linear.1} parent=0
    _
  %s10 = ssub.s32 1, %s8
  %s11 = scalar_select 0, %s10, %s8
  $region1: #{bayesian_linear.1} parent=0
    #allocation3 [shape = 'u8[4096]{0}', space=vmem, size = 0x1000, scoped, tag = 'input window, operand 0, single buffered']
    #allocation4 [shape = 's32[1]{0}', space=sflag, size = 0x4, scoped, tag = 'scoped memory for bayesian_linear.1']
    #allocation5 [shape = 's32[1]{0}', space=sflag, size = 0x4, scoped, tag = 'scoped memory for bayesian_linear.1']
    #allocation6 [shape = 'u8[65536]{0}', space=vmem, size = 0x10000, scoped, tag = 'input window, operand 1, single buffered']
    #allocation7 [shape = 's32[1]{0}', space=sflag, size = 0x4, scoped, tag = 'scoped memory for bayesian_linear.1']
    #allocation8 [shape = 'u8[65536]{0}', space=vmem, size = 0x10000, scoped, tag = 'input window, operand 2, single buffered']
    #allocation9 [shape = 'u8[65536]{0}', space=vmem, size = 0x10000, scoped, tag = 'input window, operand 3, single buffered']
    #allocation10 [shape = 's32[1]{0}', space=sflag, size = 0x4, scoped, tag = 'scoped memory for bayesian_linear.1']
    #allocation11 [shape = 'u8[512]{0}', space=vmem, size = 0x400, scoped, tag = 'input window, operand 4, single buffered']
    #allocation12 [shape = 'u8[512]{0}', space=vmem, size = 0x400, scoped, tag = 'input window, operand 5, single buffered']
    #allocation13 [shape = 's32[1]{0}', space=sflag, size = 0x4, scoped, tag = 'scoped memory for bayesian_linear.1']
    #allocation14 [shape = 'u8[512]{0}', space=vmem, size = 0x400, scoped, tag = 'input window, operand 6, single buffered']
    #allocation15 [shape = 'u8[4096]{0}', space=vmem, size = 0x1000, scoped, tag = 'output window, operand 0, single buffered']
    %12 = vsyncpa [#allocation4], 0
    %13 = vsyncpa [#allocation7], 0
    %14 = vsyncpa [#allocation10], 0
    %15 = vsyncpa [#allocation13], 0
    %16 = vsyncpa [#allocation5], 0
    // Predicated region
    $region2: #{bayesian_linear.1} parent=1 // pred_check
      _
    $region3: #{bayesian_linear.1} parent=1 // pred_check_branch
      %18 = sbr.rel (0) target = $region5
    $region4: #{bayesian_linear.1} parent=1 // pred_region
      %s20 = ssub.s32 128, 128
      %21 = vsyncadd [#allocation4], %s20
      %s23 = sshll.u32 [#allocation3], 4
      %s24 = int_to_ptr.vmem [resolvable:$true] %s23
      %26 = dma.hbm_to_vmem [thread:$0]  %s0, 128, %s24, [#allocation4]
    $region5: #{bayesian_linear.1} parent=1 // pred_fallthru
      _
    // Predicated region
    $region6: #{bayesian_linear.1} parent=1 // pred_check
      _
    $region7: #{bayesian_linear.1} parent=1 // pred_check_branch
      %28 = sbr.rel (0) target = $region9
    $region8: #{bayesian_linear.1} parent=1 // pred_region
      %s30 = ssub.s32 2048, 2048
      %31 = vsyncadd [#allocation7], %s30
      %s32 = sshll.u32 [#allocation6], 4
      %s33 = int_to_ptr.vmem [resolvable:$true] %s32
      %38 = dma.hbm_to_vmem [thread:$0]  %s1, 2048, %s33, [#allocation7], 128, 128, 8
    $region9: #{bayesian_linear.1} parent=1 // pred_fallthru
      _
    // Predicated region
    $region10: #{bayesian_linear.1} parent=1 // pred_check
      _
    $region11: #{bayesian_linear.1} parent=1 // pred_check_branch
      %40 = sbr.rel (0) target = $region13
    $region12: #{bayesian_linear.1} parent=1 // pred_region
      %s42 = ssub.s32 2048, 2048
      %43 = vsyncadd [#allocation7], %s42
      %s44 = sshll.u32 [#allocation8], 4
      %s45 = int_to_ptr.vmem [resolvable:$true] %s44
      %50 = dma.hbm_to_vmem [thread:$0]  %s2, 2048, %s45, [#allocation7], 128, 128, 8
    $region13: #{bayesian_linear.1} parent=1 // pred_fallthru
      _
    // Predicated region
    $region14: #{bayesian_linear.1} parent=1 // pred_check
      _
    $region15: #{bayesian_linear.1} parent=1 // pred_check_branch
      %52 = sbr.rel (0) target = $region17
    $region16: #{bayesian_linear.1} parent=1 // pred_region
      %s54 = ssub.s32 2048, 2048
      %55 = vsyncadd [#allocation10], %s54
      %s56 = sshll.u32 [#allocation9], 4
      %s57 = int_to_ptr.vmem [resolvable:$true] %s56
      %62 = dma.hbm_to_vmem [thread:$0]  %s3, 2048, %s57, [#allocation10], 128, 128, 8
    $region17: #{bayesian_linear.1} parent=1 // pred_fallthru
      _
    // Predicated region
    $region18: #{bayesian_linear.1} parent=1 // pred_check
      _
    $region19: #{bayesian_linear.1} parent=1 // pred_check_branch
      %64 = sbr.rel (0) target = $region21
    $region20: #{bayesian_linear.1} parent=1 // pred_region
      %s66 = ssub.s32 16, 16
      %67 = vsyncadd [#allocation10], %s66
      %s69 = sshll.u32 [#allocation11], 4
      %s70 = int_to_ptr.vmem [resolvable:$true] %s69
      %72 = dma.hbm_to_vmem [thread:$0]  %s4, 16, %s70, [#allocation10]
    $region21: #{bayesian_linear.1} parent=1 // pred_fallthru
      _
    // Predicated region
    $region22: #{bayesian_linear.1} parent=1 // pred_check
      _
    $region23: #{bayesian_linear.1} parent=1 // pred_check_branch
      %74 = sbr.rel (0) target = $region25
    $region24: #{bayesian_linear.1} parent=1 // pred_region
      %s76 = ssub.s32 16, 16
      %77 = vsyncadd [#allocation13], %s76
      %s79 = sshll.u32 [#allocation12], 4
      %s80 = int_to_ptr.vmem [resolvable:$true] %s79
      %82 = dma.hbm_to_vmem [thread:$0]  %s5, 16, %s80, [#allocation13]
    $region25: #{bayesian_linear.1} parent=1 // pred_fallthru
      _
    // Predicated region
    $region26: #{bayesian_linear.1} parent=1 // pred_check
      _
    $region27: #{bayesian_linear.1} parent=1 // pred_check_branch
      %84 = sbr.rel (0) target = $region29
    $region28: #{bayesian_linear.1} parent=1 // pred_region
      %s86 = ssub.s32 16, 16
      %87 = vsyncadd [#allocation13], %s86
      %s89 = sshll.u32 [#allocation14], 4
      %s90 = int_to_ptr.vmem [resolvable:$true] %s89
      %92 = dma.hbm_to_vmem [thread:$0]  %s6, 16, %s90, [#allocation13]
    $region29: #{bayesian_linear.1} parent=1 // pred_fallthru
      _
    // Predicated region
    $region30: #{bayesian_linear.1} parent=1 // pred_check
      _
    $region31: #{bayesian_linear.1} parent=1 // pred_check_branch
      %94 = sbr.rel (0) target = $region33
    $region32: #{bayesian_linear.1} parent=1 // pred_region
      %95 = dma.done [#allocation4], 128
    $region33: #{bayesian_linear.1} parent=1 // pred_fallthru
      _
    // Predicated region
    $region34: #{bayesian_linear.1} parent=1 // pred_check
      _
    $region35: #{bayesian_linear.1} parent=1 // pred_check_branch
      %97 = sbr.rel (0) target = $region37
    $region36: #{bayesian_linear.1} parent=1 // pred_region
      %98 = dma.done [#allocation7], 2048
    $region37: #{bayesian_linear.1} parent=1 // pred_fallthru
      _
    // Predicated region
    $region38: #{bayesian_linear.1} parent=1 // pred_check
      _
    $region39: #{bayesian_linear.1} parent=1 // pred_check_branch
      %100 = sbr.rel (0) target = $region41
    $region40: #{bayesian_linear.1} parent=1 // pred_region
      %101 = dma.done [#allocation7], 2048
    $region41: #{bayesian_linear.1} parent=1 // pred_fallthru
      _
    // Predicated region
    $region42: #{bayesian_linear.1} parent=1 // pred_check
      _
    $region43: #{bayesian_linear.1} parent=1 // pred_check_branch
      %103 = sbr.rel (0) target = $region45
    $region44: #{bayesian_linear.1} parent=1 // pred_region
      %104 = dma.done [#allocation10], 2048
    $region45: #{bayesian_linear.1} parent=1 // pred_fallthru
      _
    // Predicated region
    $region46: #{bayesian_linear.1} parent=1 // pred_check
      _
    $region47: #{bayesian_linear.1} parent=1 // pred_check_branch
      %106 = sbr.rel (0) target = $region49
    $region48: #{bayesian_linear.1} parent=1 // pred_region
      %107 = dma.done [#allocation10], 16
    $region49: #{bayesian_linear.1} parent=1 // pred_fallthru
      _
    // Predicated region
    $region50: #{bayesian_linear.1} parent=1 // pred_check
      _
    $region51: #{bayesian_linear.1} parent=1 // pred_check_branch
      %109 = sbr.rel (0) target = $region53
    $region52: #{bayesian_linear.1} parent=1 // pred_region
      %110 = dma.done [#allocation13], 16
    $region53: #{bayesian_linear.1} parent=1 // pred_fallthru
      _
    // Predicated region
    $region54: #{bayesian_linear.1} parent=1 // pred_check
      _
    $region55: #{bayesian_linear.1} parent=1 // pred_check_branch
      %112 = sbr.rel (0) target = $region57
    $region56: #{bayesian_linear.1} parent=1 // pred_region
      %113 = dma.done [#allocation13], 16
    $region57: #{bayesian_linear.1} parent=1 // pred_fallthru
      _
    %p114 = scmp.eq.s32.totalorder 0, 0
    // Predicated region
    $region58: #{bayesian_linear.1} parent=1 // pred_check
      %p115 = pneg %p114
    $region59: #{bayesian_linear.1} parent=1 // pred_check_branch
      %117 = sbr.rel (%p115) target = $region61
    $region60: #{bayesian_linear.1} parent=1 // pred_region
      %118 = vst [vmem:[#allocation2] sm:$0xff] 0.0
    $region61: #{bayesian_linear.1} parent=1 // pred_fallthru
      _
    %v119 = vld [vmem:[#allocation6] sm:$0xff]
    %v120 = vld [vmem:[#allocation6 + $0x8] sm:$0xff]
    %v121 = vld [vmem:[#allocation6 + $0x10] sm:$0xff]
    %v122 = vld [vmem:[#allocation6 + $0x18] sm:$0xff]
    %v123 = vld [vmem:[#allocation6 + $0x20] sm:$0xff]
    %v124 = vld [vmem:[#allocation6 + $0x28] sm:$0xff]
    %v125 = vld [vmem:[#allocation6 + $0x30] sm:$0xff]
    %v126 = vld [vmem:[#allocation6 + $0x38] sm:$0xff]
    %v127 = vld [vmem:[#allocation6 + $0x40] sm:$0xff]
    %v128 = vld [vmem:[#allocation6 + $0x48] sm:$0xff]
    %v129 = vld [vmem:[#allocation6 + $0x50] sm:$0xff]
    %v130 = vld [vmem:[#allocation6 + $0x58] sm:$0xff]
    %v131 = vld [vmem:[#allocation6 + $0x60] sm:$0xff]
    %v132 = vld [vmem:[#allocation6 + $0x68] sm:$0xff]
    %v133 = vld [vmem:[#allocation6 + $0x70] sm:$0xff]
    %v134 = vld [vmem:[#allocation6 + $0x78] sm:$0xff]
    %v135 = vld [vmem:[#allocation8] sm:$0xff]
    %v136 = vld [vmem:[#allocation8 + $0x8] sm:$0xff]
    %v137 = vld [vmem:[#allocation8 + $0x10] sm:$0xff]
    %v138 = vld [vmem:[#allocation8 + $0x18] sm:$0xff]
    %v139 = vld [vmem:[#allocation8 + $0x20] sm:$0xff]
    %v140 = vld [vmem:[#allocation8 + $0x28] sm:$0xff]
    %v141 = vld [vmem:[#allocation8 + $0x30] sm:$0xff]
    %v142 = vld [vmem:[#allocation8 + $0x38] sm:$0xff]
    %v143 = vld [vmem:[#allocation8 + $0x40] sm:$0xff]
    %v144 = vld [vmem:[#allocation8 + $0x48] sm:$0xff]
    %v145 = vld [vmem:[#allocation8 + $0x50] sm:$0xff]
    %v146 = vld [vmem:[#allocation8 + $0x58] sm:$0xff]
    %v147 = vld [vmem:[#allocation8 + $0x60] sm:$0xff]
    %v148 = vld [vmem:[#allocation8 + $0x68] sm:$0xff]
    %v149 = vld [vmem:[#allocation8 + $0x70] sm:$0xff]
    %v150 = vld [vmem:[#allocation8 + $0x78] sm:$0xff]
    %v151 = vmul.f32 %v135, 1.442695
    %v152 = vpow.pop %v151
    %v153 = vmul.f32 %v136, 1.442695
    %v154 = vpow.pop %v153
    %v155 = vmul.f32 %v137, 1.442695
    %v156 = vpow.pop %v155
    %v157 = vmul.f32 %v138, 1.442695
    %v158 = vpow.pop %v157
    %v159 = vmul.f32 %v139, 1.442695
    %v160 = vpow.pop %v159
    %v161 = vmul.f32 %v140, 1.442695
    %v162 = vpow.pop %v161
    %v163 = vmul.f32 %v141, 1.442695
    %v164 = vpow.pop %v163
    %v165 = vmul.f32 %v142, 1.442695
    %v166 = vpow.pop %v165
    %v167 = vmul.f32 %v143, 1.442695
    %v168 = vpow.pop %v167
    %v169 = vmul.f32 %v144, 1.442695
    %v170 = vpow.pop %v169
    %v171 = vmul.f32 %v145, 1.442695
    %v172 = vpow.pop %v171
    %v173 = vmul.f32 %v146, 1.442695
    %v174 = vpow.pop %v173
    %v175 = vmul.f32 %v147, 1.442695
    %v176 = vpow.pop %v175
    %v177 = vmul.f32 %v148, 1.442695
    %v178 = vpow.pop %v177
    %v179 = vmul.f32 %v149, 1.442695
    %v180 = vpow.pop %v179
    %v181 = vmul.f32 %v150, 1.442695
    %v182 = vpow.pop %v181
    %v183 = vld [vmem:[#allocation9] sm:$0xff]
    %v184 = vld [vmem:[#allocation9 + $0x8] sm:$0xff]
    %v185 = vld [vmem:[#allocation9 + $0x10] sm:$0xff]
    %v186 = vld [vmem:[#allocation9 + $0x18] sm:$0xff]
    %v187 = vld [vmem:[#allocation9 + $0x20] sm:$0xff]
    %v188 = vld [vmem:[#allocation9 + $0x28] sm:$0xff]
    %v189 = vld [vmem:[#allocation9 + $0x30] sm:$0xff]
    %v190 = vld [vmem:[#allocation9 + $0x38] sm:$0xff]
    %v191 = vld [vmem:[#allocation9 + $0x40] sm:$0xff]
    %v192 = vld [vmem:[#allocation9 + $0x48] sm:$0xff]
    %v193 = vld [vmem:[#allocation9 + $0x50] sm:$0xff]
    %v194 = vld [vmem:[#allocation9 + $0x58] sm:$0xff]
    %v195 = vld [vmem:[#allocation9 + $0x60] sm:$0xff]
    %v196 = vld [vmem:[#allocation9 + $0x68] sm:$0xff]
    %v197 = vld [vmem:[#allocation9 + $0x70] sm:$0xff]
    %v198 = vld [vmem:[#allocation9 + $0x78] sm:$0xff]
    %v199 = vmul.f32 %v152, %v183
    %v200 = vmul.f32 %v154, %v184
    %v201 = vmul.f32 %v156, %v185
    %v202 = vmul.f32 %v158, %v186
    %v203 = vmul.f32 %v160, %v187
    %v204 = vmul.f32 %v162, %v188
    %v205 = vmul.f32 %v164, %v189
    %v206 = vmul.f32 %v166, %v190
    %v207 = vmul.f32 %v168, %v191
    %v208 = vmul.f32 %v170, %v192
    %v209 = vmul.f32 %v172, %v193
    %v210 = vmul.f32 %v174, %v194
    %v211 = vmul.f32 %v176, %v195
    %v212 = vmul.f32 %v178, %v196
    %v213 = vmul.f32 %v180, %v197
    %v214 = vmul.f32 %v182, %v198
    %v215 = vadd.f32 %v119, %v199
    %v216 = vadd.f32 %v120, %v200
    %v217 = vadd.f32 %v121, %v201
    %v218 = vadd.f32 %v122, %v202
    %v219 = vadd.f32 %v123, %v203
    %v220 = vadd.f32 %v124, %v204
    %v221 = vadd.f32 %v125, %v205
    %v222 = vadd.f32 %v126, %v206
    %v223 = vadd.f32 %v127, %v207
    %v224 = vadd.f32 %v128, %v208
    %v225 = vadd.f32 %v129, %v209
    %v226 = vadd.f32 %v130, %v210
    %v227 = vadd.f32 %v131, %v211
    %v228 = vadd.f32 %v132, %v212
    %v229 = vadd.f32 %v133, %v213
    %v230 = vadd.f32 %v134, %v214
    %v231 = vld [vmem:[#allocation2] sm:$0xff]
    %v232 = vld [vmem:[#allocation3] sm:$0xff]
    %233 = vmatprep.subr.mxu0 0.0
    %234 = vmatpush1.xpose.msra.mxu0 %v215
    %235 = vmatprep.subr.mxu0 0.0
    %236 = vmatpush1.xpose.msra.mxu0 %v216
    %237 = vmatprep.subr.mxu0 0.0
    %238 = vmatpush1.xpose.msra.mxu0 %v217
    %239 = vmatprep.subr.mxu0 0.0
    %240 = vmatpush1.xpose.msra.mxu0 %v218
    %241 = vmatprep.subr.mxu0 0.0
    %242 = vmatpush1.xpose.msra.mxu0 %v219
    %243 = vmatprep.subr.mxu0 0.0
    %244 = vmatpush1.xpose.msra.mxu0 %v220
    %245 = vmatprep.subr.mxu0 0.0
    %246 = vmatpush1.xpose.msra.mxu0 %v221
    %247 = vmatprep.subr.mxu0 0.0
    %248 = vmatpush1.xpose.msra.mxu0 %v222
    %249 = vmatprep.subr.mxu0 0.0
    %250 = vmatpush1.xpose.msra.mxu0 %v223
    %251 = vmatprep.subr.mxu0 0.0
    %252 = vmatpush1.xpose.msra.mxu0 %v224
    %253 = vmatprep.subr.mxu0 0.0
    %254 = vmatpush1.xpose.msra.mxu0 %v225
    %255 = vmatprep.subr.mxu0 0.0
    %256 = vmatpush1.xpose.msra.mxu0 %v226
    %257 = vmatprep.subr.mxu0 0.0
    %258 = vmatpush1.xpose.msra.mxu0 %v227
    %259 = vmatprep.subr.mxu0 0.0
    %260 = vmatpush1.xpose.msra.mxu0 %v228
    %261 = vmatprep.subr.mxu0 0.0
    %262 = vmatpush1.xpose.msra.mxu0 %v229
    %263 = vmatprep.subr.mxu0 0.0
    %264 = vmatpush1.xpose.msra.mxu0 %v230
    %265 = vmatprep.subr.mxu0 0.0
    %266 = vmatpush1.xpose.msra.mxu0 0.0
    %267 = vmatprep.subr.mxu0 0.0
    %268 = vmatpush1.xpose.msra.mxu0 0.0
    %269 = vmatprep.subr.mxu0 0.0
    %270 = vmatpush1.xpose.msra.mxu0 0.0
    %271 = vmatprep.subr.mxu0 0.0
    %272 = vmatpush1.xpose.msra.mxu0 0.0
    %273 = vmatprep.subr.mxu0 0.0
    %274 = vmatpush1.xpose.msra.mxu0 0.0
    %275 = vmatprep.subr.mxu0 0.0
    %276 = vmatpush1.xpose.msra.mxu0 0.0
    %277 = vmatprep.subr.mxu0 0.0
    %278 = vmatpush1.xpose.msra.mxu0 0.0
    %279 = vmatprep.subr.mxu0 0.0
    %280 = vmatpush1.xpose.msra.mxu0 0.0
    %281 = vmatprep.subr.mxu0 0.0
    %282 = vmatpush1.xpose.msra.mxu0 0.0
    %283 = vmatprep.subr.mxu0 0.0
    %284 = vmatpush1.xpose.msra.mxu0 0.0
    %285 = vmatprep.subr.mxu0 0.0
    %286 = vmatpush1.xpose.msra.mxu0 0.0
    %287 = vmatprep.subr.mxu0 0.0
    %288 = vmatpush1.xpose.msra.mxu0 0.0
    %289 = vmatprep.subr.mxu0 0.0
    %290 = vmatpush1.xpose.msra.mxu0 0.0
    %291 = vmatprep.subr.mxu0 0.0
    %292 = vmatpush1.xpose.msra.mxu0 0.0
    %293 = vmatprep.subr.mxu0 0.0
    %294 = vmatpush1.xpose.msra.mxu0 0.0
    %295 = vmatprep.subr.mxu0 0.0
    %296 = vmatpush1.xpose.msra.mxu0 0.0
    %297 = vmatprep.mubr.f32.mxu0 0.0
    %298 = vmatmul.mubr.f32.gmra.mrb[0].mxu0 %v232
    %v299 = vpop.f32.mrb[0].mxu0
    %v300 = vadd.f32 0.0, %v299
    %v301 = vpop.f32.mrb[0].mxu0
    %302 = vdwg.mxu0
    %v303 = vadd.f32 %v231, %v300
    %304 = vst [vmem:[#allocation2] sm:$0xff] %v303
    // Predicated region
    $region62: #{bayesian_linear.1} parent=1 // pred_check
      %p305 = pneg %p114
    $region63: #{bayesian_linear.1} parent=1 // pred_check_branch
      %307 = sbr.rel (%p305) target = $region65
    $region64: #{bayesian_linear.1} parent=1 // pred_region
      %v308 = vld [vmem:[#allocation11] sm:$0x1]
      %v309 = vld [vmem:[#allocation12] sm:$0x1]
      %v310 = vmul.f32 %v309, 1.442695
      %v311 = vpow.pop %v310
      %v312 = vld [vmem:[#allocation14] sm:$0x1]
      %v313 = vmul.f32 %v311, %v312
      %v314 = vadd.f32 %v308, %v313
      %v315 = vld [vmem:[#allocation2] sm:$0xff]
      %v317 = vlaneseq
      %v318 = vshrl.u32 %v317, 7
      %v319 = vsub.s32 0, %v318
      %v320 = vrot.slane %v314, %v319
      %v322 = vadd.f32 %v315, %v320
      %323 = vst [vmem:[#allocation15] sm:$0xff] %v322
    $region65: #{bayesian_linear.1} parent=1 // pred_fallthru
      _
    // Predicated region
    $region66: #{bayesian_linear.1} parent=1 // pred_check
      _
    $region67: #{bayesian_linear.1} parent=1 // pred_check_branch
      %325 = sbr.rel (0) target = $region69
    $region68: #{bayesian_linear.1} parent=1 // pred_region
      %s327 = ssub.s32 128, 128
      %328 = vsyncadd [#allocation5], %s327
      %s330 = sshll.u32 [#allocation15], 4
      %s331 = int_to_ptr.vmem [resolvable:$true] %s330
      %333 = dma.vmem_to_hbm [thread:$0]  %s331, 128, %s7, [#allocation5]
    $region69: #{bayesian_linear.1} parent=1 // pred_fallthru
      _
    // Predicated region
    $region70: #{bayesian_linear.1} parent=1 // pred_check
      _
    $region71: #{bayesian_linear.1} parent=1 // pred_check_branch
      %335 = sbr.rel (0) target = $region73
    $region72: #{bayesian_linear.1} parent=1 // pred_region
      %336 = dma.done [#allocation5], 128
    $region73: #{bayesian_linear.1} parent=1 // pred_fallthru
      _
    %337 = vsyncpa [#allocation4], 1
    %338 = vsyncpa [#allocation7], 1
    %339 = vsyncpa [#allocation10], 1
    %340 = vsyncpa [#allocation13], 1
    %341 = vsyncpa [#allocation5], 1

</llo_original>
